<compile_context>
chip_gen: v5e
topology: v5e:2x2
jax: 0.10.0
libtpu: 0.0.40
codegen_flags: <defaults>
</compile_context>

<pallas_src>
import functools

import jax
import jax.numpy as jnp
from jax.experimental import pallas as pl
from jax.experimental.pallas import tpu as pltpu


def _mesh_conv_kernel(x_ref, w_ref, b_ref, o_ref, *, nb, c_in, c_out, use_vpu):
    # x_ref: (NB, C_in, TL)  current (batch-block, L-tile)
    # w_ref: (C_out, C_in)   fused weight (Laplacian folded in), resident
    # b_ref: (C_out, 1)      fused bias, resident
    # o_ref: (NB, C_out, TL)
    tl = x_ref.shape[2]

    if use_vpu:
        # Tiny-channel regime: keep the mix on the VPU (plenty of VALU slack in a
        # mem-bound kernel) instead of paying MXU push/pop latency for a channel sliver.
        # Vectorized over the folded batch; x stays in its native dtype and is cast per
        # channel row, so no full-tile f32 copy of x is materialized.
        w32 = w_ref[...].astype(jnp.float32)                    # (C_out, C_in), tiny
        b32 = b_ref[...].astype(jnp.float32)                    # (C_out, 1)
        x = x_ref[...]                                          # (NB, C_in, TL), native dtype
        acc = jnp.broadcast_to(b32[None], (nb, c_out, tl))      # bias, once per tile
        for c in range(c_in):                                   # statically unrolled
            acc = acc + w32[None, :, c:c + 1] * x[:, c:c + 1, :].astype(jnp.float32)
        o_ref[...] = acc.astype(o_ref.dtype)
    else:
        # MXU fallback: keep native-dtype operands (bf16 stays bf16 -> native MXU path),
        # rely on preferred_element_type for the f32 accumulation.
        w = w_ref[...]
        b32 = b_ref[...].astype(jnp.float32)
        for bi in range(nb):                                    # nb == 1 on this path
            acc = jnp.dot(w, x_ref[bi], preferred_element_type=jnp.float32) + b32
            o_ref[bi] = acc.astype(o_ref.dtype)


def _round_up(x, m):
    return ((x + m - 1) // m) * m


def _vmem_capacity_bytes():
    """Per-core VMEM capacity; conservative fallback (v7x = 64 MiB) if query fails."""
    try:
        return int(pltpu.get_tpu_info().vmem_capacity_bytes)
    except Exception:
        return 64 * 1024 * 1024


def _choose_tiles(N, L, c_in, c_out, itemsize, budget, use_vpu):
    """Pick (NB, TL): the largest lane-dense L tile (plus batch fold) whose
    double-buffered x/out tiles + f32 temporaries fit within `budget` bytes."""
    sub = max(8, 32 // itemsize)                   # sublane granularity: f32->8, bf16->16
    cin_p = _round_up(c_in, sub)                   # channels are padded in VMEM anyway
    cout_p = _round_up(c_out, sub)
    # Bytes per lane (per L element) for one batch element:
    #   2x double-buffered input + output tiles (native dtype, channel-padded)
    #   + f32 accumulator rows (C_out) + f32 per-row cast slack (C_in).
    per_lane = 2 * (cin_p + cout_p) * itemsize + 4 * (cout_p + cin_p)
    max_tl = max(1, budget // per_lane)

    if L <= 128 or max_tl >= L:
        tl = L                                     # full extent (always BlockSpec-legal)
        if use_vpu:
            # Fold batch elements into each block: one contiguous HBM slab per step.
            nb = max(1, min(N, budget // max(1, per_lane * L)))
        else:
            nb = 1
    else:
        tl = max(128, (max_tl // 128) * 128)       # lane-dense multiple of 128
        nb = 1
    return nb, tl


def mesh_conv(x, weight, bias, laplacian=None, mesh_norm=True,
              l_tile=None, n_block=None):
    """x: (N, C_in, L); weight: (C_out, C_in) (Conv1d k=1 kernel, squeezed);
    bias: (C_out,); laplacian: (C_out, C_out) constant.  Returns (N, C_out, L)."""
    N, C_in, L = x.shape
    C_out = weight.shape[0]
    dtype = x.dtype
    itemsize = jnp.dtype(dtype).itemsize

    if mesh_norm and laplacian is None:
        raise ValueError("mesh_norm=True requires a laplacian matrix")

    # Fold the constant Laplacian into the conv parameters (runs once, outside kernel).
    w32 = weight.astype(jnp.float32)
    b32 = bias.astype(jnp.float32)
    if mesh_norm:
        lap32 = laplacian.astype(jnp.float32)
        w_fused = lap32 @ w32                      # (C_out, C_in)
        b_fused = lap32 @ b32                      # (C_out,)
    else:
        w_fused, b_fused = w32, b32
    w_fused = w_fused.astype(dtype)
    b_fused = b_fused.reshape(C_out, 1).astype(dtype)

    # Generation-aware VMEM sizing: 3/4 of reported capacity as the scoped limit
    # (48 MiB on v7x's 64 MiB, 96 MiB on v5e/v6e's 128 MiB), half of that as the
    # live-tile budget used for tile selection.
    vmem_cap = _vmem_capacity_bytes()
    vmem_limit = min((vmem_cap * 3) // 4, 96 * 1024 * 1024)
    budget = vmem_limit // 2

    use_vpu = (C_in <= 16) and (C_out <= 64)

    NB, TL = _choose_tiles(N, L, C_in, C_out, itemsize, budget, use_vpu)
    if l_tile is not None:
        TL = l_tile
    if n_block is not None:
        NB = n_block
    NB = max(1, min(NB, N))

    n_blocks = pl.cdiv(N, NB)
    l_tiles = pl.cdiv(L, TL)

    # Keep at least 2 grid steps so both TensorCores on v7x get work.
    if l_tile is None and n_block is None and n_blocks * l_tiles == 1:
        if N >= 2:
            NB = pl.cdiv(N, 2)
            n_blocks = pl.cdiv(N, NB)
        elif L >= 256:
            TL = max(128, _round_up(pl.cdiv(L, 2), 128))
            l_tiles = pl.cdiv(L, TL)

    kernel = functools.partial(_mesh_conv_kernel, nb=NB, c_in=C_in, c_out=C_out,
                               use_vpu=use_vpu)

    return pl.pallas_call(
        kernel,
        out_shape=jax.ShapeDtypeStruct((N, C_out, L), dtype),
        grid_spec=pl.GridSpec(
            grid=(n_blocks, l_tiles),
            in_specs=[
                pl.BlockSpec((NB, C_in, TL), lambda n, l: (n, 0, l)),
                # Resident params (constant index_map).  NOTE: a single-buffer
                # pipeline_mode here would save one tiny duplicate buffer; skipped
                # since the saving is a few KiB and not worth compile risk.
                pl.BlockSpec((C_out, C_in), lambda n, l: (0, 0)),
                pl.BlockSpec((C_out, 1), lambda n, l: (0, 0)),
            ],
            out_specs=pl.BlockSpec((NB, C_out, TL), lambda n, l: (n, 0, l)),
        ),
        compiler_params=pltpu.CompilerParams(
            dimension_semantics=("parallel", "parallel"),
            vmem_limit_bytes=vmem_limit,
        ),
    )(x, w_fused, b_fused)


def mesh_conv_ref(x, weight, bias, laplacian=None, mesh_norm=True):
    # Pure-JAX reference mirroring the two-step PyTorch forward (no fusion).
    y = jnp.einsum("oc,ncl->nol", weight, x) + bias[None, :, None]
    if mesh_norm:
        y = jnp.einsum("po,nol->npl", laplacian, y)
    return y


if __name__ == "__main__":
    # Small, deterministic example shapes (Conv1d k=1 regime of MeshCNN).
    N, C_in, C_out, L = 2, 4, 8, 512

    key = jax.random.PRNGKey(0)
    kx, kw, kb, kl = jax.random.split(key, 4)

    x = jax.random.normal(kx, (N, C_in, L), dtype=jnp.float32)

    # Conv1d(in, out, kernel_size=1) params: weight (C_out, C_in, 1) squeezed, bias (C_out,)
    w_full = jax.random.normal(kw, (C_out, C_in, 1), dtype=jnp.float32) * 0.1
    weight = w_full[:, :, 0]
    bias = jax.random.normal(kb, (C_out,), dtype=jnp.float32) * 0.1

    # mesh.laplacian: detached constant; square so matmul(lap, y) preserves shape.
    laplacian = jax.random.normal(kl, (C_out, C_out), dtype=jnp.float32) * 0.1

    # 1) mesh_norm=True, forced small L tiles so the multi-step grid (with batch fold)
    #    is exercised.
    out = mesh_conv(x, weight, bias, laplacian, mesh_norm=True, l_tile=256)
    out = jax.block_until_ready(out)
    ref = mesh_conv_ref(x, weight, bias, laplacian, mesh_norm=True)
    assert out.shape == (N, C_out, L), out.shape
    assert jnp.allclose(out, ref, atol=1e-5, rtol=1e-5), float(jnp.max(jnp.abs(out - ref)))

    # 2) mesh_norm=False, fully automatic tiling (full-L tile, >=2 grid steps).
    out2 = mesh_conv(x, weight, bias, mesh_norm=False)
    out2 = jax.block_until_ready(out2)
    ref2 = mesh_conv_ref(x, weight, bias, mesh_norm=False)
    assert jnp.allclose(out2, ref2, atol=1e-5, rtol=1e-5), float(jnp.max(jnp.abs(out2 - ref2)))

    # 3) bf16 activations end-to-end (recommended deployment dtype: halves HBM traffic;
    #    f32 accumulation inside the kernel).  Checked against an f32 reference with
    #    bf16-level tolerance.
    xb = x.astype(jnp.bfloat16)
    out3 = mesh_conv(xb, weight, bias, laplacian, mesh_norm=True)
    out3 = jax.block_until_ready(out3)
    ref3 = mesh_conv_ref(xb.astype(jnp.float32), weight, bias, laplacian, mesh_norm=True)
    err3 = float(jnp.max(jnp.abs(out3.astype(jnp.float32) - ref3)))
    assert jnp.allclose(out3.astype(jnp.float32), ref3, atol=5e-2, rtol=5e-2), err3

    print("KERNEL_OK")
</pallas_src>

<mosaic_0001>
module attributes {stable_mosaic.version = 11 : i64} {
  func.func @_mesh_conv_kernel(%arg0: i32, %arg1: i32, %arg2: memref<2x4x256xf32, #tpu.memory_space<vmem>>, %arg3: memref<8x4xf32, #tpu.memory_space<vmem>>, %arg4: memref<8x1xf32, #tpu.memory_space<vmem>>, %arg5: memref<2x8x256xf32, #tpu.memory_space<vmem>>) attributes {dimension_semantics = [#tpu.dimension_semantics<parallel>, #tpu.dimension_semantics<parallel>], iteration_bounds = array<i64: 1, 2>, scalar_prefetch = 0 : i64, scratch_operands = 0 : i64, tpu.core_type = #tpu.core_type<tc>, window_params = [{transform_indices = @transform_0, window_bounds = array<i64: 2, 4, 256>}, {pipeline_mode = #tpu.pipeline_mode<synchronous>, transform_indices = @transform_1, window_bounds = array<i64: 8, 4>}, {pipeline_mode = #tpu.pipeline_mode<synchronous>, transform_indices = @transform_2, window_bounds = array<i64: 8, 1>}, {transform_indices = @transform_3, window_bounds = array<i64: 2, 8, 256>}]} {
    %c0 = arith.constant 0 : index
    %c0_0 = arith.constant 0 : index
    %0 = vector.load %arg3[%c0, %c0_0] : memref<8x4xf32, #tpu.memory_space<vmem>>, vector<8x4xf32>
    %c0_1 = arith.constant 0 : index
    %c0_2 = arith.constant 0 : index
    %1 = vector.load %arg4[%c0_1, %c0_2] : memref<8x1xf32, #tpu.memory_space<vmem>>, vector<8x1xf32>
    %c0_3 = arith.constant 0 : index
    %c0_4 = arith.constant 0 : index
    %c0_5 = arith.constant 0 : index
    %2 = vector.load %arg2[%c0_3, %c0_4, %c0_5] : memref<2x4x256xf32, #tpu.memory_space<vmem>>, vector<2x4x256xf32>
    %3 = vector.shape_cast %1 : vector<8x1xf32> to vector<1x8x1xf32>
    %4 = vector.shape_cast %3 : vector<1x8x1xf32> to vector<1x8x1xf32>
    %5 = vector.broadcast %4 : vector<1x8x1xf32> to vector<2x8x256xf32>
    %6 = vector.extract_strided_slice %0 {offsets = [0, 0], sizes = [8, 1], strides = [1, 1]} : vector<8x4xf32> to vector<8x1xf32>
    %7 = vector.shape_cast %6 : vector<8x1xf32> to vector<1x8x1xf32>
    %8 = vector.extract_strided_slice %2 {offsets = [0, 0, 0], sizes = [2, 1, 256], strides = [1, 1, 1]} : vector<2x4x256xf32> to vector<2x1x256xf32>
    %9 = vector.broadcast %7 : vector<1x8x1xf32> to vector<2x8x256xf32>
    %10 = vector.broadcast %8 : vector<2x1x256xf32> to vector<2x8x256xf32>
    %11 = arith.mulf %9, %10 : vector<2x8x256xf32>
    %12 = arith.addf %5, %11 : vector<2x8x256xf32>
    %13 = vector.extract_strided_slice %0 {offsets = [0, 1], sizes = [8, 1], strides = [1, 1]} : vector<8x4xf32> to vector<8x1xf32>
    %14 = vector.shape_cast %13 : vector<8x1xf32> to vector<1x8x1xf32>
    %15 = vector.extract_strided_slice %2 {offsets = [0, 1, 0], sizes = [2, 1, 256], strides = [1, 1, 1]} : vector<2x4x256xf32> to vector<2x1x256xf32>
    %16 = vector.broadcast %14 : vector<1x8x1xf32> to vector<2x8x256xf32>
    %17 = vector.broadcast %15 : vector<2x1x256xf32> to vector<2x8x256xf32>
    %18 = arith.mulf %16, %17 : vector<2x8x256xf32>
    %19 = arith.addf %12, %18 : vector<2x8x256xf32>
    %20 = vector.extract_strided_slice %0 {offsets = [0, 2], sizes = [8, 1], strides = [1, 1]} : vector<8x4xf32> to vector<8x1xf32>
    %21 = vector.shape_cast %20 : vector<8x1xf32> to vector<1x8x1xf32>
    %22 = vector.extract_strided_slice %2 {offsets = [0, 2, 0], sizes = [2, 1, 256], strides = [1, 1, 1]} : vector<2x4x256xf32> to vector<2x1x256xf32>
    %23 = vector.broadcast %21 : vector<1x8x1xf32> to vector<2x8x256xf32>
    %24 = vector.broadcast %22 : vector<2x1x256xf32> to vector<2x8x256xf32>
    %25 = arith.mulf %23, %24 : vector<2x8x256xf32>
    %26 = arith.addf %19, %25 : vector<2x8x256xf32>
    %27 = vector.extract_strided_slice %0 {offsets = [0, 3], sizes = [8, 1], strides = [1, 1]} : vector<8x4xf32> to vector<8x1xf32>
    %28 = vector.shape_cast %27 : vector<8x1xf32> to vector<1x8x1xf32>
    %29 = vector.extract_strided_slice %2 {offsets = [0, 3, 0], sizes = [2, 1, 256], strides = [1, 1, 1]} : vector<2x4x256xf32> to vector<2x1x256xf32>
    %30 = vector.broadcast %28 : vector<1x8x1xf32> to vector<2x8x256xf32>
    %31 = vector.broadcast %29 : vector<2x1x256xf32> to vector<2x8x256xf32>
    %32 = arith.mulf %30, %31 : vector<2x8x256xf32>
    %33 = arith.addf %26, %32 : vector<2x8x256xf32>
    %c0_6 = arith.constant 0 : index
    %c0_7 = arith.constant 0 : index
    %c0_8 = arith.constant 0 : index
    %34 = vector.load %arg5[%c0_6, %c0_7, %c0_8] : memref<2x8x256xf32, #tpu.memory_space<vmem>>, vector<2x8x256xf32>
    tpu.vector_store %arg5[%c0_6, %c0_7, %c0_8], %33 {strides = array<i32>} : memref<2x8x256xf32, #tpu.memory_space<vmem>>, vector<2x8x256xf32>,
    return
  }
  func.func @transform_0(%arg0: i32, %arg1: i32) -> (i32, i32, i32) {
    %c0_i32 = arith.constant 0 : i32
    %c0_i32_0 = arith.constant 0 : i32
    return %arg0, %c0_i32, %arg1 : i32, i32, i32
  }
  func.func @transform_1(%arg0: i32, %arg1: i32) -> (i32, i32) {
    %c0_i32 = arith.constant 0 : i32
    %c0_i32_0 = arith.constant 0 : i32
    %c0_i32_1 = arith.constant 0 : i32
    return %c0_i32, %c0_i32_0 : i32, i32
  }
  func.func @transform_2(%arg0: i32, %arg1: i32) -> (i32, i32) {
    %c0_i32 = arith.constant 0 : i32
    %c0_i32_0 = arith.constant 0 : i32
    %c0_i32_1 = arith.constant 0 : i32
    return %c0_i32, %c0_i32_0 : i32, i32
  }
  func.func @transform_3(%arg0: i32, %arg1: i32) -> (i32, i32, i32) {
    %c0_i32 = arith.constant 0 : i32
    %c0_i32_0 = arith.constant 0 : i32
    return %arg0, %c0_i32, %arg1 : i32, i32, i32
  }
}

</mosaic_0001>

<llo_original>
// kernel: tpu_custom_call.1
$region0: #{tpu_custom_call.1}
  #allocation0 [shape = 'u32[]', space=smem, size = 0x4, offset = 0x4, fixed_abs, tag = 'smem constant byte address 0x4 - core index']
  #allocation1 [shape = 'u32[72,128]{1,0:T(1,128)}', space=vmem, size = 0x9000, scoped, tag = 'internal scratch']
  %s0 = inlined_call_operand.hbm [shape: f32[2,4,512], index: 0, kind: input, shape index: {}]
  %s1 = inlined_call_operand.vmem [shape: f32[8,4], index: 1, kind: input, shape index: {}]
  %s2 = inlined_call_operand.vmem [shape: f32[8,1], index: 2, kind: input, shape index: {}]
  %s3 = inlined_call_operand.hbm [shape: f32[2,8,512], index: 3, kind: output, shape index: {}]
  %s4 = sld [smem:[#allocation0]]
  $region49: #{tpu_custom_call.1} parent=0
    _
  %s6 = ssub.s32 1, %s4
  %s7 = scalar_select 0, %s6, %s4
  $region1: #{tpu_custom_call.1} parent=0
    #allocation2 [shape = 'u8[16384]{0}', space=vmem, size = 0x4000, scoped, tag = 'input window, operand 0']
    #allocation3 [shape = 's32[2]{0}', space=sflag, size = 0x8, scoped, tag = 'scoped memory for tpu_custom_call.1']
    #allocation4 [shape = 's32[2]{0}', space=sflag, size = 0x8, scoped, tag = 'scoped memory for tpu_custom_call.1']
    #allocation5 [shape = 'u8[32768]{0}', space=vmem, size = 0x8000, scoped, tag = 'output window, operand 0']
    %8 = vsyncpa [#allocation3], 0
    %s9 = scalar_lea.sflag [#allocation3], 1
    %10 = vsyncpa %s9, 0
    %11 = vsyncpa [#allocation4], 0
    %s12 = scalar_lea.sflag [#allocation4], 1
    %13 = vsyncpa %s12, 0
    loop: start=0, step=1, limit=4
    $region2: #{tpu_custom_call.1} parent=1 // loop_pre_header
      _
    $region3: #{tpu_custom_call.1} parent=1 // loop_header
      %s15 = sphi 0, %s19
      %p16 = scmp.ge.s32.totalorder %s15, 4
      %s22 = sphi 0, %s34
      %s23 = sphi 0, %s30
      %s24 = sphi 0, %s22
      %s25 = sphi 0, %s23
      %s26 = sphi 0, %s24
      %s27 = sphi 0, %s25
      %s39 = sphi 0, %s41
      %s42 = sphi 0, %s39
      %s43 = sphi 0, %s42
      %s59 = sphi 0, %s43
      %s63 = sphi 0, %s63
      %s65 = sphi 0, %s63
      %s66 = sphi 0, %s65
      %s80 = sphi 0, %s66
      %s84 = sphi 0, %s84
      %s86 = sphi 0, %s84
      %s87 = sphi 0, %s86
      %s101 = sphi 0, %s87
      %s109 = sphi 0, %s111
      %s112 = sphi 0, %s109
      %s113 = sphi 0, %s112
      %s129 = sphi 0, %s113
    $region4: #{tpu_custom_call.1} parent=1 // loop_header_branch
      %18 = sbr.rel (%p16) target = $region8
    $region5: #{tpu_custom_call.1} parent=1 // loop_body
      %s20 = ssub.s32 %s15, 1
      %s21 = ssub.s32 %s15, 2
      %s28 = sadd.s32 1, %s23
      %p29 = scmp.ge.s32.totalorder %s28, 2
      %s30 = scalar_select %p29, 0, %s28
      %s31 = sadd.s32 1, %s22
      %s32 = scalar_select %p29, %s31, %s22
      %p33 = scmp.ge.s32.totalorder %s32, 1
      %s34 = scalar_select %p33, 0, %s32
      %s35 = ssub.s32 %s22, %s34
      %s36 = ssub.s32 %s23, %s30
      %s37 = sor.u32 %s35, %s36
      %p38 = scmp.eq.s32.totalorder %s37, 0
      %s40 = sadd.s32 %s39, 1
      %s41 = scalar_select %p38, %s39, %s40
      %p44 = pneg %p38
      %p45 = scmp.eq.s32.totalorder %s15, 1
      %p46 = por %p44, %p45
      %p47 = scmp.ne.s32.totalorder %s39, %s42
      %p48 = scmp.eq.s32.totalorder %s15, 0
      %p49 = por %p47, %p48
      %p50 = scmp.ne.s32.totalorder %s39, %s42
      %p51 = scmp.eq.s32.totalorder %s20, 1
      %p52 = por %p50, %p51
      %p53 = scmp.ne.s32.totalorder %s42, %s43
      %p54 = scmp.eq.s32.totalorder %s20, 0
      %p55 = por %p53, %p54
      %p56 = scmp.ne.s32.totalorder %s42, %s43
      %p57 = scmp.eq.s32.totalorder %s21, 1
      %p58 = por %p56, %p57
      %p60 = scmp.ne.s32.totalorder %s43, %s59
      %p61 = scmp.eq.s32.totalorder %s21, 0
      %p62 = por %p60, %p61
      %s64 = sadd.s32 %s63, 1
      %p67 = scmp.eq.s32.totalorder %s15, 1
      %p68 = scmp.ne.s32.totalorder %s63, %s65
      %p69 = scmp.eq.s32.totalorder %s15, 0
      %p70 = por %p68, %p69
      %p71 = scmp.ne.s32.totalorder %s63, %s65
      %p72 = scmp.eq.s32.totalorder %s20, 1
      %p73 = por %p71, %p72
      %p74 = scmp.ne.s32.totalorder %s65, %s66
      %p75 = scmp.eq.s32.totalorder %s20, 0
      %p76 = por %p74, %p75
      %p77 = scmp.ne.s32.totalorder %s65, %s66
      %p78 = scmp.eq.s32.totalorder %s21, 1
      %p79 = por %p77, %p78
      %p81 = scmp.ne.s32.totalorder %s66, %s80
      %p82 = scmp.eq.s32.totalorder %s21, 0
      %p83 = por %p81, %p82
      %s85 = sadd.s32 %s84, 1
      %p88 = scmp.eq.s32.totalorder %s15, 1
      %p89 = scmp.ne.s32.totalorder %s84, %s86
      %p90 = scmp.eq.s32.totalorder %s15, 0
      %p91 = por %p89, %p90
      %p92 = scmp.ne.s32.totalorder %s84, %s86
      %p93 = scmp.eq.s32.totalorder %s20, 1
      %p94 = por %p92, %p93
      %p95 = scmp.ne.s32.totalorder %s86, %s87
      %p96 = scmp.eq.s32.totalorder %s20, 0
      %p97 = por %p95, %p96
      %p98 = scmp.ne.s32.totalorder %s86, %s87
      %p99 = scmp.eq.s32.totalorder %s21, 1
      %p100 = por %p98, %p99
      %p102 = scmp.ne.s32.totalorder %s87, %s101
      %p103 = scmp.eq.s32.totalorder %s21, 0
      %p104 = por %p102, %p103
      %s105 = ssub.s32 %s22, %s34
      %s106 = ssub.s32 %s23, %s30
      %s107 = sor.u32 %s105, %s106
      %p108 = scmp.eq.s32.totalorder %s107, 0
      %s110 = sadd.s32 %s109, 1
      %s111 = scalar_select %p108, %s109, %s110
      %p114 = pneg %p108
      %p115 = scmp.eq.s32.totalorder %s15, 1
      %p116 = por %p114, %p115
      %p117 = scmp.ne.s32.totalorder %s109, %s112
      %p118 = scmp.eq.s32.totalorder %s15, 0
      %p119 = por %p117, %p118
      %p120 = scmp.ne.s32.totalorder %s109, %s112
      %p121 = scmp.eq.s32.totalorder %s20, 1
      %p122 = por %p120, %p121
      %p123 = scmp.ne.s32.totalorder %s112, %s113
      %p124 = scmp.eq.s32.totalorder %s20, 0
      %p125 = por %p123, %p124
      %p126 = scmp.ne.s32.totalorder %s112, %s113
      %p127 = scmp.eq.s32.totalorder %s21, 1
      %p128 = por %p126, %p127
      %p130 = scmp.ne.s32.totalorder %s113, %s129
      %p131 = scmp.eq.s32.totalorder %s21, 0
      %p132 = por %p130, %p131
      %p133 = scmp.le.s32.totalorder 1, %s15
      %p134 = scmp.lt.s32.totalorder %s15, 3
      %p135 = pnand %p133, %p134
      %p136 = pneg %p135
      // Predicated region
      $region9: #{tpu_custom_call.1} parent=5 // pred_check
        _
      $region10: #{tpu_custom_call.1} parent=5 // pred_check_branch
        %138 = sbr.rel (%p135) target = $region12
      $region11: #{tpu_custom_call.1} parent=5 // pred_region
        %s139 = ssub.s32 %s15, 1
        // Predicated region
        $region13: #{tpu_custom_call.1} parent=11 // pred_check
          %p140 = pneg %p76
        $region14: #{tpu_custom_call.1} parent=11 // pred_check_branch
          %142 = sbr.rel (%p140) target = $region16
        $region15: #{tpu_custom_call.1} parent=11 // pred_region
          _
        $region16: #{tpu_custom_call.1} parent=11 // pred_fallthru
          _
        // Predicated region
        $region17: #{tpu_custom_call.1} parent=11 // pred_check
          %p143 = pneg %p97
        $region18: #{tpu_custom_call.1} parent=11 // pred_check_branch
          %145 = sbr.rel (%p143) target = $region20
        $region19: #{tpu_custom_call.1} parent=11 // pred_region
          _
        $region20: #{tpu_custom_call.1} parent=11 // pred_fallthru
          _
      $region12: #{tpu_custom_call.1} parent=5 // pred_fallthru
        _
      %p146 = scmp.lt.s32.totalorder %s15, 2
      // Predicated region
      $region21: #{tpu_custom_call.1} parent=5 // pred_check
        %p147 = pneg %p146
      $region22: #{tpu_custom_call.1} parent=5 // pred_check_branch
        %149 = sbr.rel (%p147) target = $region24
      $region23: #{tpu_custom_call.1} parent=5 // pred_region
        // Predicated region
        $region25: #{tpu_custom_call.1} parent=23 // pred_check
          %p150 = pneg %p49
        $region26: #{tpu_custom_call.1} parent=23 // pred_check_branch
          %152 = sbr.rel (%p150) target = $region28
        $region27: #{tpu_custom_call.1} parent=23 // pred_region
          %s153 = sand.u32 %s39, 1
          %s154 = scalar_lea.sflag [#allocation3], %s153
          %s155 = sand.u32 %s39, 1
          %s156 = smul.addr %s155, 16
          %s157 = scalar_lea.vmem [#allocation2], %s156
          %s158 = smul.u32 2, %s22
          %s159 = smul.u32 2, %s23
          %161 = vsyncadd %s154, 0
          %s162 = smul.addr %s158, 4
          %s163 = sadd.s32 %s159, %s162
          %s164 = smul.addr %s163, 4
          %s165 = scalar_lea.hbm %s0, %s164
          %s166 = sshll.u32 %s165, 4
          %s167 = int_to_ptr.hbm [resolvable:$true] %s166
          %s168 = sshll.u32 %s157, 4
          %s169 = int_to_ptr.vmem [resolvable:$true] %s168
          %174 = dma.hbm_to_vmem [thread:$0]  %s167, 256, %s169, %s154, 256, 128, 8
        $region28: #{tpu_custom_call.1} parent=23 // pred_fallthru
          _
      $region24: #{tpu_custom_call.1} parent=5 // pred_fallthru
        _
      %p175 = scmp.le.s32.totalorder 1, %s15
      %p176 = scmp.lt.s32.totalorder %s15, 3
      %p177 = pnand %p175, %p176
      %p178 = pneg %p177
      // Predicated region
      $region29: #{tpu_custom_call.1} parent=5 // pred_check
        _
      $region30: #{tpu_custom_call.1} parent=5 // pred_check_branch
        %180 = sbr.rel (%p177) target = $region32
      $region31: #{tpu_custom_call.1} parent=5 // pred_region
        %s181 = ssub.s32 %s15, 1
        %s182 = sand.u32 %s42, 1
        %s183 = scalar_lea.sflag [#allocation3], %s182
        %s184 = sand.u32 %s42, 1
        %s185 = smul.addr %s184, 16
        %s186 = scalar_lea.vmem [#allocation2], %s185
        // Predicated region
        $region33: #{tpu_custom_call.1} parent=31 // pred_check
          %p187 = pneg %p55
        $region34: #{tpu_custom_call.1} parent=31 // pred_check_branch
          %189 = sbr.rel (%p187) target = $region36
        $region35: #{tpu_custom_call.1} parent=31 // pred_region
          %191 = dma.done %s183, 256
        $region36: #{tpu_custom_call.1} parent=31 // pred_fallthru
          _
        %s192 = sand.u32 %s42, 1
        %s193 = scalar_lea.sflag [#allocation3], %s192
        %s194 = sand.u32 %s42, 1
        %s195 = smul.addr %s194, 16
        %s196 = scalar_lea.vmem [#allocation2], %s195
        %p197 = pneg %p55
        %p198 = pneg %p52
        %p199 = pneg %p76
        %p200 = pneg %p73
        %p201 = pneg %p97
        %p202 = pneg %p94
        %p203 = pneg %p125
        %p204 = pneg %p122
        %s205 = sand.u32 %s112, 1
        %s206 = scalar_lea.sflag [#allocation4], %s205
        %s207 = sand.u32 %s112, 1
        %s208 = smul.addr %s207, 32
        %s209 = scalar_lea.vmem [#allocation5], %s208
        %s210 = smul.u32 2, %s24
        %s211 = smul.u32 2, %s25
        %s212 = smul.u32 2, %s24
        %s213 = smul.u32 2, %s25
        %v214 = vld [vmem:[%s1] sm:$0xff]
        %v215 = vld [vmem:[%s2] sm:$0xff]
        %v216 = vld [vmem:[%s186] sm:$0xff]
        %v217 = vld [vmem:[%s186 + $0x8] sm:$0xff]
        %219 = vset.pattern.permute.xlu0 0
        %220 = vperm.xlu0 %219, %v215
        %v221 = vpop.permute.xlu0 %220
        %224 = vset.pattern.permute.xlu0 0
        %225 = vperm.xlu0 %224, %v214
        %v226 = vpop.permute.xlu0 %225
        %v230 = vperm.slane %v216, 0
        %v231 = vperm.slane %v216, 4
        %v232 = vperm.slane %v217, 0
        %v233 = vperm.slane %v217, 4
        %v238 = vperm.slane %v230, 0
        %v239 = vperm.slane %v231, 0
        %v240 = vperm.slane %v232, 0
        %v241 = vperm.slane %v233, 0
        %v242 = vmul.f32 %v226, %v238
        %v243 = vmul.f32 %v226, %v239
        %v244 = vmul.f32 %v226, %v240
        %v245 = vmul.f32 %v226, %v241
        %v246 = vadd.f32 %v221, %v242
        %v247 = vadd.f32 %v221, %v243
        %v248 = vadd.f32 %v221, %v244
        %v249 = vadd.f32 %v221, %v245
        %250 = vset.pattern.permute.xlu0 1
        %251 = vperm.xlu0 %250, %v214
        %v252 = vpop.permute.xlu0 %251
        %v254 = vperm.slane %v216, 1
        %v255 = vperm.slane %v216, 5
        %v256 = vperm.slane %v217, 1
        %v257 = vperm.slane %v217, 5
        %v262 = vperm.slane %v254, 1
        %v263 = vperm.slane %v255, 1
        %v264 = vperm.slane %v256, 1
        %v265 = vperm.slane %v257, 1
        %v266 = vmul.f32 %v252, %v262
        %v267 = vmul.f32 %v252, %v263
        %v268 = vmul.f32 %v252, %v264
        %v269 = vmul.f32 %v252, %v265
        %v270 = vadd.f32 %v246, %v266
        %v271 = vadd.f32 %v247, %v267
        %v272 = vadd.f32 %v248, %v268
        %v273 = vadd.f32 %v249, %v269
        %274 = vset.pattern.permute.xlu0 2
        %275 = vperm.xlu0 %274, %v214
        %v276 = vpop.permute.xlu0 %275
        %v278 = vperm.slane %v216, 2
        %v279 = vperm.slane %v216, 6
        %v280 = vperm.slane %v217, 2
        %v281 = vperm.slane %v217, 6
        %v286 = vperm.slane %v278, 2
        %v287 = vperm.slane %v279, 2
        %v288 = vperm.slane %v280, 2
        %v289 = vperm.slane %v281, 2
        %v290 = vmul.f32 %v276, %v286
        %v291 = vmul.f32 %v276, %v287
        %v292 = vmul.f32 %v276, %v288
        %v293 = vmul.f32 %v276, %v289
        %v294 = vadd.f32 %v270, %v290
        %v295 = vadd.f32 %v271, %v291
        %v296 = vadd.f32 %v272, %v292
        %v297 = vadd.f32 %v273, %v293
        %298 = vset.pattern.permute.xlu0 3
        %299 = vperm.xlu0 %298, %v214
        %v300 = vpop.permute.xlu0 %299
        %v302 = vperm.slane %v216, 3
        %v303 = vperm.slane %v216, 7
        %v304 = vperm.slane %v217, 3
        %v305 = vperm.slane %v217, 7
        %v310 = vperm.slane %v302, 3
        %v311 = vperm.slane %v303, 3
        %v312 = vperm.slane %v304, 3
        %v313 = vperm.slane %v305, 3
        %v314 = vmul.f32 %v300, %v310
        %v315 = vmul.f32 %v300, %v311
        %v316 = vmul.f32 %v300, %v312
        %v317 = vmul.f32 %v300, %v313
        %v318 = vadd.f32 %v294, %v314
        %v319 = vadd.f32 %v295, %v315
        %v320 = vadd.f32 %v296, %v316
        %v321 = vadd.f32 %v297, %v317
        %322 = vst [vmem:[%s209] sm:$0xff] %v318
        %323 = vst [vmem:[%s209 + $0x8] sm:$0xff] %v319
        %324 = vst [vmem:[%s209 + $0x10] sm:$0xff] %v320
        %325 = vst [vmem:[%s209 + $0x18] sm:$0xff] %v321
        %s326 = sand.u32 %s112, 1
        %s327 = scalar_lea.sflag [#allocation4], %s326
        %s328 = sand.u32 %s112, 1
        %s329 = smul.addr %s328, 32
        %s330 = scalar_lea.vmem [#allocation5], %s329
        // Predicated region
        $region37: #{tpu_custom_call.1} parent=31 // pred_check
          %p331 = pneg %p122
        $region38: #{tpu_custom_call.1} parent=31 // pred_check_branch
          %333 = sbr.rel (%p331) target = $region40
        $region39: #{tpu_custom_call.1} parent=31 // pred_region
          %s334 = smul.u32 2, %s24
          %s335 = smul.u32 2, %s25
          %337 = vsyncadd %s327, 0
          %s338 = smul.addr %s334, 4
          %s339 = sadd.s32 %s335, %s338
          %s340 = smul.addr %s339, 8
          %s341 = scalar_lea.hbm %s3, %s340
          %s342 = sshll.u32 %s330, 4
          %s343 = int_to_ptr.vmem [resolvable:$true] %s342
          %s344 = sshll.u32 %s341, 4
          %s345 = int_to_ptr.hbm [resolvable:$true] %s344
          %350 = dma.vmem_to_hbm [thread:$0]  %s343, 512, %s345, %s327, 256, 512, 16
        $region40: #{tpu_custom_call.1} parent=31 // pred_fallthru
          _
      $region32: #{tpu_custom_call.1} parent=5 // pred_fallthru
        _
      %p351 = scmp.le.s32.totalorder 2, %s15
      // Predicated region
      $region41: #{tpu_custom_call.1} parent=5 // pred_check
        %p352 = pneg %p351
      $region42: #{tpu_custom_call.1} parent=5 // pred_check_branch
        %354 = sbr.rel (%p352) target = $region44
      $region43: #{tpu_custom_call.1} parent=5 // pred_region
        %s355 = ssub.s32 %s15, 2
        // Predicated region
        $region45: #{tpu_custom_call.1} parent=43 // pred_check
          %p356 = pneg %p128
        $region46: #{tpu_custom_call.1} parent=43 // pred_check_branch
          %358 = sbr.rel (%p356) target = $region48
        $region47: #{tpu_custom_call.1} parent=43 // pred_region
          %s359 = sand.u32 %s113, 1
          %s360 = scalar_lea.sflag [#allocation4], %s359
          %s361 = sand.u32 %s113, 1
          %s362 = smul.addr %s361, 32
          %s363 = scalar_lea.vmem [#allocation5], %s362
          %365 = dma.done %s360, 512
        $region48: #{tpu_custom_call.1} parent=43 // pred_fallthru
          _
      $region44: #{tpu_custom_call.1} parent=5 // pred_fallthru
        _
    $region6: #{tpu_custom_call.1} parent=1 // loop_footer
      %s19 = sadd.s32 1, %s15
    $region7: #{tpu_custom_call.1} parent=1 // loop_footer_branch
      %14 = sbr.rel target = $region3
    $region8: #{tpu_custom_call.1} parent=1 // loop_exit
      _
    %366 = vsyncpa [#allocation3], 1
    %s367 = scalar_lea.sflag [#allocation3], 1
    %368 = vsyncpa %s367, 1
    %369 = vsyncpa [#allocation4], 1
    %s370 = scalar_lea.sflag [#allocation4], 1
    %371 = vsyncpa %s370, 1

</llo_original>
